<compile_context>
chip_gen: v7x
topology: tpu7x:2x2x1
jax: 0.10.0
libtpu: 0.0.40
codegen_flags: <defaults>
</compile_context>

<pallas_src>
import math
import functools

import jax
import jax.numpy as jnp
from jax.experimental import pallas as pl
from jax.experimental.pallas import tpu as pltpu


CHUNK = 8  # timesteps per scan iteration == sublane height


def _gelu_tanh(x):
    # tanh-approximate GELU: one EUP tanh + a few VPU ops (vs. long erf poly).
    c = math.sqrt(2.0 / math.pi)
    return 0.5 * x * (1.0 + jnp.tanh(c * (x + 0.044715 * x * x * x)))


# ----------------------------------------------------------------------------
# Kernel 1: row-tiled linear layer  y = x @ W + b   (input_proj / output_proj)
# ----------------------------------------------------------------------------
def linear_kernel(x_ref, w_ref, b_ref, o_ref):
    o_ref[...] = (
        jnp.dot(x_ref[...], w_ref[...], preferred_element_type=jnp.float32)
        + b_ref[...]
    )


def linear(x2d, w_t, bias, *, block_m=256):
    M, K = x2d.shape
    N = w_t.shape[1]
    bm = block_m if (M % block_m == 0) else M  # edge case for tiny demo shapes
    return pl.pallas_call(
        linear_kernel,
        out_shape=jax.ShapeDtypeStruct((M, N), jnp.float32),
        grid=(M // bm,),
        in_specs=[
            pl.BlockSpec((bm, K), lambda i: (i, 0)),
            pl.BlockSpec((K, N), lambda i: (0, 0)),
            pl.BlockSpec((1, N), lambda i: (0, 0)),
        ],
        out_specs=pl.BlockSpec((bm, N), lambda i: (i, 0)),
        compiler_params=pltpu.CompilerParams(dimension_semantics=("parallel",)),
    )(x2d.astype(jnp.bfloat16), w_t.astype(jnp.bfloat16),
      bias.reshape(1, N).astype(jnp.float32))


# ----------------------------------------------------------------------------
# Kernel 2: the whole LRU layer stack for one batch element.
#   grid = (B, layers); the activation lives in the output VMEM block across
#   the layer axis. Per layer: LayerNorm -> LRU -> GLU -> + residual.
# ----------------------------------------------------------------------------
def lru_stack_kernel(x_ref, lnw_ref, lnb_ref, pow_ref, wb_ref, wc_ref, wg_ref,
                     bg_ref, o_ref, seq_scr, *, seq_len, state_dim, chunk):
    N = state_dim
    T = seq_len
    layer = pl.program_id(1)

    # Layer 0 consumes the pallas input block; later layers consume the
    # resident output block (kept in VMEM across the "arbitrary" layer axis).
    @pl.when(layer == 0)
    def _():
        o_ref[...] = x_ref[...]

    x = o_ref[0]                                           # (T, N) layer input

    # --- LayerNorm (eps=1e-5, biased variance, affine), fp32 ---
    mean = jnp.mean(x, axis=-1, keepdims=True)
    xc = x - mean
    var = jnp.mean(xc * xc, axis=-1, keepdims=True)
    h = xc * jax.lax.rsqrt(var + 1e-5) * lnw_ref[0] + lnb_ref[0]

    # --- fused complex input projection:  u = h @ [Bn_re.T | Bn_im.T] ---
    # single (T,N)x(N,2N) bf16 matmul, fp32 accumulation, columns = [re | im]
    seq_scr[...] = jnp.dot(h.astype(jnp.bfloat16), wb_ref[0],
                           preferred_element_type=jnp.float32)

    # --- diagonal complex recurrence s_t = Lambda*s_{t-1} + u_t ---
    # chunked scan: `chunk` timesteps per fori_loop iteration; within a chunk a
    # log2(chunk)-step Hillis-Steele combine using sublane rolls; the carry
    # between chunks is folded in with precomputed Lambda^{k+1} powers.
    pw = pow_ref[0]                                        # (chunk, 2N) fp32
    pw_re = pw[:, :N]                                      # Lambda^{k+1} real
    pw_im = pw[:, N:]                                      # Lambda^{k+1} imag
    row = jax.lax.broadcasted_iota(jnp.int32, (chunk, N), 0)
    n_steps = chunk.bit_length() - 1                       # log2(chunk)

    def chunk_body(c, carry):
        c_re, c_im = carry                                 # (1, N) fp32 state
        t0 = pl.multiple_of(c * chunk, chunk)
        u = seq_scr[pl.ds(t0, chunk), :]                   # (chunk, 2N)
        b_re = u[:, :N]
        b_im = u[:, N:]
        for j in range(n_steps):                           # static unroll (3)
            d = 1 << j
            ld_re = pw_re[d - 1:d, :]                      # Lambda^d  (1, N)
            ld_im = pw_im[d - 1:d, :]
            sh_re = pltpu.roll(b_re, shift=d, axis=0)      # b[k-d] -> row k
            sh_im = pltpu.roll(b_im, shift=d, axis=0)
            keep = row >= d
            sh_re = jnp.where(keep, sh_re, 0.0)
            sh_im = jnp.where(keep, sh_im, 0.0)
            b_re, b_im = (ld_re * sh_re - ld_im * sh_im + b_re,
                          ld_re * sh_im + ld_im * sh_re + b_im)
        # fold in the carried state: s_k = Lambda^{k+1} * carry + b_k
        s_re = pw_re * c_re - pw_im * c_im + b_re
        s_im = pw_re * c_im + pw_im * c_re + b_im
        # overwrite the consumed u-rows with the states (reuses the scratch)
        seq_scr[pl.ds(t0, chunk), :] = jnp.concatenate([s_re, s_im], axis=1)
        return (s_re[chunk - 1:chunk, :], s_im[chunk - 1:chunk, :])

    zero = jnp.zeros((1, N), jnp.float32)
    jax.lax.fori_loop(0, T // chunk, chunk_body, (zero, zero))

    # --- fused output projection: y = Re(states @ C.T) ---
    # [s_re | s_im] @ [C_re.T ; -C_im.T] : single (T,2N)x(2N,N) bf16 matmul
    y = jnp.dot(seq_scr[...].astype(jnp.bfloat16), wc_ref[0],
                preferred_element_type=jnp.float32)

    # --- GLU channel mixer (dropout p=0.0 -> identity) ---
    g = _gelu_tanh(y)
    ab = jnp.dot(g.astype(jnp.bfloat16), wg_ref[0],
                 preferred_element_type=jnp.float32) + bg_ref[0]   # (T, 2N)
    glu = ab[:, :N] * jax.nn.sigmoid(ab[:, N:])

    # --- residual: re-read the resident layer input (not kept live above) ---
    o_ref[0] = glu + o_ref[0]


def lru_stack(x, lnw, lnb, pows, wb, wc, wg, bg, *, chunk=CHUNK):
    B, T, N = x.shape
    L = lnw.shape[0]
    N2 = 2 * N
    kern = functools.partial(lru_stack_kernel, seq_len=T, state_dim=N,
                             chunk=chunk)
    return pl.pallas_call(
        kern,
        out_shape=jax.ShapeDtypeStruct((B, T, N), jnp.float32),
        grid=(B, L),
        in_specs=[
            pl.BlockSpec((1, T, N), lambda b, l: (b, 0, 0)),       # x (layer-0 input)
            pl.BlockSpec((1, 1, N), lambda b, l: (l, 0, 0)),       # LN weight
            pl.BlockSpec((1, 1, N), lambda b, l: (l, 0, 0)),       # LN bias
            pl.BlockSpec((1, chunk, N2), lambda b, l: (l, 0, 0)),  # Lambda powers
            pl.BlockSpec((1, N, N2), lambda b, l: (l, 0, 0)),      # [Bn_re.T|Bn_im.T] bf16
            pl.BlockSpec((1, N2, N), lambda b, l: (l, 0, 0)),      # [C_re.T;-C_im.T] bf16
            pl.BlockSpec((1, N, N2), lambda b, l: (l, 0, 0)),      # GLU weight.T bf16
            pl.BlockSpec((1, 1, N2), lambda b, l: (l, 0, 0)),      # GLU bias
        ],
        out_specs=pl.BlockSpec((1, T, N), lambda b, l: (b, 0, 0)),
        scratch_shapes=[pltpu.VMEM((T, N2), jnp.float32)],         # u -> states
        compiler_params=pltpu.CompilerParams(
            dimension_semantics=("parallel", "arbitrary")),
        # TODO(synk): for very long T on v7x (64 MiB VMEM) add a T-chunk grid
        # axis with the recurrence carry held in a small VMEM scratch.
    )(x, lnw, lnb, pows, wb, wc, wg, bg)


# ----------------------------------------------------------------------------
# Deterministic parameter initialization (mirrors the module's __init__ shapes)
# ----------------------------------------------------------------------------
def init_lru_block_params(key, input_dim, output_dim, state_dim, layers_count,
                          r_min=0.8, r_max=0.99, phase_max=2.0 * math.pi):
    k_in_w, k_in_b, k_out_w, k_out_b, k_layers = jax.random.split(key, 5)
    params = {
        "in_w": (jax.random.normal(k_in_w, (state_dim, input_dim))
                 / math.sqrt(input_dim)).astype(jnp.float32),
        "in_b": (0.01 * jax.random.normal(k_in_b, (state_dim,))).astype(jnp.float32),
        "out_w": (jax.random.normal(k_out_w, (output_dim, state_dim))
                  / math.sqrt(state_dim)).astype(jnp.float32),
        "out_b": (0.01 * jax.random.normal(k_out_b, (output_dim,))).astype(jnp.float32),
        "layers": [],
    }
    N = state_dim
    for lk in jax.random.split(k_layers, layers_count):
        ks = jax.random.split(lk, 8)
        u1 = jax.random.uniform(ks[0], (N,))
        nu_log = jnp.log(-0.5 * jnp.log(u1 * (r_max + r_min) * (r_max - r_min)
                                        + r_min ** 2))
        # tiny clamp so theta_log = log(phase_max * u2) cannot hit -inf at u2==0
        u2 = jnp.maximum(jax.random.uniform(ks[1], (N,)), 1e-6)
        theta_log = jnp.log(phase_max * u2)
        lam_mod = jnp.exp(-jnp.exp(nu_log))
        gamma_log = jnp.log(jnp.sqrt(1.0 - lam_mod ** 2))
        params["layers"].append(dict(
            ln_w=jnp.ones((N,), jnp.float32),
            ln_b=jnp.zeros((N,), jnp.float32),
            nu_log=nu_log, theta_log=theta_log, gamma_log=gamma_log,
            B_re=jax.random.normal(ks[2], (N, N)) / math.sqrt(2 * N),
            B_im=jax.random.normal(ks[3], (N, N)) / math.sqrt(2 * N),
            C_re=jax.random.normal(ks[4], (N, N)) / math.sqrt(N),
            C_im=jax.random.normal(ks[5], (N, N)) / math.sqrt(N),
            glu_w=jax.random.normal(ks[6], (2 * N, N)) / math.sqrt(N),
            glu_b=0.01 * jax.random.normal(ks[7], (2 * N,)),
        ))
    return params


# ----------------------------------------------------------------------------
# Full LRUBlock forward
# ----------------------------------------------------------------------------
def lru_block_forward(params, x):
    # x: (B, T, input_dim)
    B, T, D = x.shape
    N = params["in_w"].shape[0]
    assert T % CHUNK == 0, "sequence length must be a multiple of 8"

    h = linear(x.reshape(B * T, D), params["in_w"].T,
               params["in_b"]).reshape(B, T, N)

    # ---- cheap O(L*N^2) parameter glue: derive + fuse + stack layer weights ----
    lnw, lnb, pows, wb, wc, wg, bg = [], [], [], [], [], [], []
    k_pow = jnp.arange(1, CHUNK + 1, dtype=jnp.float32)[:, None]       # (8, 1)
    for lp in params["layers"]:
        lam_mod = jnp.exp(-jnp.exp(lp["nu_log"]))
        theta = jnp.exp(lp["theta_log"])
        # Lambda^{k+1}, k = 0..CHUNK-1 (rows 0,1,3 double as Lambda^1,^2,^4)
        pw_re = lam_mod[None, :] ** k_pow * jnp.cos(k_pow * theta[None, :])
        pw_im = lam_mod[None, :] ** k_pow * jnp.sin(k_pow * theta[None, :])
        pows.append(jnp.concatenate([pw_re, pw_im], axis=1))           # (8, 2N)
        g = jnp.exp(lp["gamma_log"])[:, None]
        bn_re = lp["B_re"] * g
        bn_im = lp["B_im"] * g
        wb.append(jnp.concatenate([bn_re.T, bn_im.T], axis=1).astype(jnp.bfloat16))
        wc.append(jnp.concatenate([lp["C_re"].T, -lp["C_im"].T],
                                  axis=0).astype(jnp.bfloat16))
        wg.append(lp["glu_w"].T.astype(jnp.bfloat16))                  # (N, 2N)
        bg.append(lp["glu_b"][None, :].astype(jnp.float32))            # (1, 2N)
        lnw.append(lp["ln_w"][None, :])
        lnb.append(lp["ln_b"][None, :])

    h = lru_stack(h,
                  jnp.stack(lnw), jnp.stack(lnb), jnp.stack(pows),
                  jnp.stack(wb), jnp.stack(wc), jnp.stack(wg), jnp.stack(bg))

    out_dim = params["out_w"].shape[0]
    y = linear(h.reshape(B * T, N), params["out_w"].T,
               params["out_b"]).reshape(B, T, out_dim)
    return y


if __name__ == "__main__":
    key = jax.random.PRNGKey(0)
    k_params, k_x = jax.random.split(key)

    B, T = 2, 8
    input_dim, output_dim, state_dim, layers_count = 16, 16, 32, 2

    params = init_lru_block_params(k_params, input_dim, output_dim,
                                   state_dim, layers_count)
    x = jax.random.normal(k_x, (B, T, input_dim), dtype=jnp.float32)

    y = lru_block_forward(params, x)
    jax.block_until_ready(y)

    assert y.shape == (B, T, output_dim), y.shape
    assert bool(jnp.all(jnp.isfinite(y)))
    # TODO(synk): dropout is a no-op (p=0.0 / eval semantics); the stateful
    # forward_with_state / initialize_inference path is not implemented.
    print("KERNEL_OK")
</pallas_src>

<mosaic_0001>
module attributes {stable_mosaic.version = 11 : i64} {
  func.func @linear_kernel(%arg0: i32, %arg1: memref<16x16xbf16, #tpu.memory_space<vmem>>, %arg2: memref<16x32xbf16, #tpu.memory_space<vmem>>, %arg3: memref<1x32xf32, #tpu.memory_space<vmem>>, %arg4: memref<16x32xf32, #tpu.memory_space<vmem>>) attributes {dimension_semantics = [#tpu.dimension_semantics<parallel>], iteration_bounds = array<i64: 1>, scalar_prefetch = 0 : i64, scratch_operands = 0 : i64, tpu.core_type = #tpu.core_type<tc>, window_params = [{transform_indices = @transform_0, window_bounds = array<i64: 16, 16>}, {pipeline_mode = #tpu.pipeline_mode<synchronous>, transform_indices = @transform_1, window_bounds = array<i64: 16, 32>}, {pipeline_mode = #tpu.pipeline_mode<synchronous>, transform_indices = @transform_2, window_bounds = array<i64: 1, 32>}, {transform_indices = @transform_3, window_bounds = array<i64: 16, 32>}]} {
    %c0 = arith.constant 0 : index
    %c0_0 = arith.constant 0 : index
    %0 = vector.load %arg1[%c0, %c0_0] : memref<16x16xbf16, #tpu.memory_space<vmem>>, vector<16x16xbf16>
    %c0_1 = arith.constant 0 : index
    %c0_2 = arith.constant 0 : index
    %1 = vector.load %arg2[%c0_1, %c0_2] : memref<16x32xbf16, #tpu.memory_space<vmem>>, vector<16x32xbf16>
    %cst = arith.constant dense<0.000000e+00> : vector<16x32xf32>
    %2 = tpu.matmul %0, %1, %cst {dimension_numbers = #tpu.dot_dimension_numbers<[1], [0], [0], [1], [0, 0, 1, 1], [], []>} : vector<16x16xbf16>, vector<16x32xbf16>, vector<16x32xf32> -> vector<16x32xf32>
    %c0_3 = arith.constant 0 : index
    %c0_4 = arith.constant 0 : index
    %3 = vector.load %arg3[%c0_3, %c0_4] : memref<1x32xf32, #tpu.memory_space<vmem>>, vector<1x32xf32>
    %4 = vector.broadcast %3 : vector<1x32xf32> to vector<16x32xf32>
    %5 = arith.addf %2, %4 : vector<16x32xf32>
    %c0_5 = arith.constant 0 : index
    %c0_6 = arith.constant 0 : index
    %6 = vector.load %arg4[%c0_5, %c0_6] : memref<16x32xf32, #tpu.memory_space<vmem>>, vector<16x32xf32>
    tpu.vector_store %arg4[%c0_5, %c0_6], %5 {strides = array<i32>} : memref<16x32xf32, #tpu.memory_space<vmem>>, vector<16x32xf32>,
    return
  }
  func.func @transform_0(%arg0: i32) -> (i32, i32) {
    %c0_i32 = arith.constant 0 : i32
    %c0_i32_0 = arith.constant 0 : i32
    return %arg0, %c0_i32 : i32, i32
  }
  func.func @transform_1(%arg0: i32) -> (i32, i32) {
    %c0_i32 = arith.constant 0 : i32
    %c0_i32_0 = arith.constant 0 : i32
    %c0_i32_1 = arith.constant 0 : i32
    return %c0_i32, %c0_i32_0 : i32, i32
  }
  func.func @transform_2(%arg0: i32) -> (i32, i32) {
    %c0_i32 = arith.constant 0 : i32
    %c0_i32_0 = arith.constant 0 : i32
    %c0_i32_1 = arith.constant 0 : i32
    return %c0_i32, %c0_i32_0 : i32, i32
  }
  func.func @transform_3(%arg0: i32) -> (i32, i32) {
    %c0_i32 = arith.constant 0 : i32
    %c0_i32_0 = arith.constant 0 : i32
    return %arg0, %c0_i32 : i32, i32
  }
}

</mosaic_0001>

<llo_original>
// kernel: tpu_custom_call.1
$region0: #{tpu_custom_call.1}
  #allocation0 [shape = 'u32[]', space=smem, size = 0x4, offset = 0x4, fixed_abs, tag = 'smem constant byte address 0x4 - core index']
  #allocation1 [shape = 'u32[144,128]{1,0:T(1,128)}', space=vmem, size = 0x12000, scoped, tag = 'internal scratch']
  %s0 = inlined_call_operand.hbm [shape: bf16[16,16], index: 0, kind: input, shape index: {}]
  %s1 = inlined_call_operand.hbm [shape: bf16[16,32], index: 1, kind: input, shape index: {}]
  %s2 = inlined_call_operand.vmem [shape: f32[1,32], index: 2, kind: input, shape index: {}]
  %s3 = inlined_call_operand.hbm [shape: f32[16,32], index: 3, kind: output, shape index: {}]
  %s4 = sld [smem:[#allocation0]]
  $region30: #{tpu_custom_call.1} parent=0
    _
  %s6 = ssub.s32 1, %s4
  %s7 = scalar_select 0, %s6, %s4
  $region1: #{tpu_custom_call.1} parent=0
    #allocation2 [shape = 'u8[4096]{0}', space=vmem, size = 0x1000, scoped, tag = 'input window, operand 0, single buffered']
    #allocation3 [shape = 's32[1]{0}', space=sflag, size = 0x4, scoped, tag = 'scoped memory for tpu_custom_call.1']
    #allocation4 [shape = 's32[1]{0}', space=sflag, size = 0x4, scoped, tag = 'scoped memory for tpu_custom_call.1']
    #allocation5 [shape = 'u8[4096]{0}', space=vmem, size = 0x1000, scoped, tag = 'input window, operand 1, single buffered']
    #allocation6 [shape = 's32[1]{0}', space=sflag, size = 0x4, scoped, tag = 'scoped memory for tpu_custom_call.1']
    #allocation7 [shape = 'u8[8192]{0}', space=vmem, size = 0x2000, scoped, tag = 'output window, operand 0, single buffered']
    %8 = vsyncpa [#allocation3], 0
    %9 = vsyncpa [#allocation6], 0
    %10 = vsyncpa [#allocation4], 0
    // Predicated region
    $region2: #{tpu_custom_call.1} parent=1 // pred_check
      _
    $region3: #{tpu_custom_call.1} parent=1 // pred_check_branch
      %12 = sbr.rel (0) target = $region5
    $region4: #{tpu_custom_call.1} parent=1 // pred_region
      %s14 = ssub.s32 128, 128
      %15 = vsyncadd [#allocation3], %s14
      %s16 = sshll.u32 [#allocation2], 4
      %s17 = int_to_ptr.vmem [resolvable:$true] %s16
      %22 = dma.hbm_to_vmem [thread:$0]  %s0, 128, %s17, [#allocation3], 64, 64, 4
    $region5: #{tpu_custom_call.1} parent=1 // pred_fallthru
      _
    // Predicated region
    $region6: #{tpu_custom_call.1} parent=1 // pred_check
      _
    $region7: #{tpu_custom_call.1} parent=1 // pred_check_branch
      %24 = sbr.rel (0) target = $region9
    $region8: #{tpu_custom_call.1} parent=1 // pred_region
      %s26 = ssub.s32 128, 128
      %27 = vsyncadd [#allocation6], %s26
      %s28 = sshll.u32 [#allocation5], 4
      %s29 = int_to_ptr.vmem [resolvable:$true] %s28
      %34 = dma.hbm_to_vmem [thread:$0]  %s1, 128, %s29, [#allocation6], 64, 64, 4
    $region9: #{tpu_custom_call.1} parent=1 // pred_fallthru
      _
    // Predicated region
    $region10: #{tpu_custom_call.1} parent=1 // pred_check
      _
    $region11: #{tpu_custom_call.1} parent=1 // pred_check_branch
      %36 = sbr.rel (0) target = $region13
    $region12: #{tpu_custom_call.1} parent=1 // pred_region
      _
    $region13: #{tpu_custom_call.1} parent=1 // pred_fallthru
      _
    // Predicated region
    $region14: #{tpu_custom_call.1} parent=1 // pred_check
      _
    $region15: #{tpu_custom_call.1} parent=1 // pred_check_branch
      %38 = sbr.rel (0) target = $region17
    $region16: #{tpu_custom_call.1} parent=1 // pred_region
      %39 = dma.done [#allocation3], 128
    $region17: #{tpu_custom_call.1} parent=1 // pred_fallthru
      _
    // Predicated region
    $region18: #{tpu_custom_call.1} parent=1 // pred_check
      _
    $region19: #{tpu_custom_call.1} parent=1 // pred_check_branch
      %41 = sbr.rel (0) target = $region21
    $region20: #{tpu_custom_call.1} parent=1 // pred_region
      %42 = dma.done [#allocation6], 128
    $region21: #{tpu_custom_call.1} parent=1 // pred_fallthru
      _
    %v44 = vld [vmem:[#allocation2] sm:$0xf]
    %v45 = vld [vmem:[#allocation2 + $0x4] sm:$0xf]
    %v46 = vld [vmem:[#allocation5] sm:$0xf]
    %v47 = vld [vmem:[#allocation5 + $0x4] sm:$0xf]
    %v48 = vld [vmem:[%s2] sm:$0x1]
    %v50 = vlaneseq
    %v51 = vshrl.u32 %v50, 7
    %v52 = vsub.s32 0, %v51
    %v53 = vrot.slane %v48, %v52
    %v57 = vunpack.c.l.b16 %v44
    %v58 = vunpack.c.l.b16 %v45
    %v59 = vpack.c.b16 %v58, %v57
    %v62 = vunpack.c.l.b16 %v46
    %v63 = vunpack.c.l.b16 %v47
    %v64 = vpack.c.b16 %v63, %v62
    %vm66 = vcmask 130048
    %v68 = vsel %vm66, %v59, 0
    %70 = vmatprep.subr.bf16.mxu0 0
    %71 = vmatpush1.bf16.msra.mxu0 %v64
    %72 = vmatprep.subr.bf16.mxu0 0
    %73 = vmatpush1.bf16.msra.mxu0 0
    %74 = vmatprep.subr.bf16.mxu0 0
    %75 = vmatpush1.bf16.msra.mxu0 0
    %76 = vmatprep.subr.bf16.mxu0 0
    %77 = vmatpush1.bf16.msra.mxu0 0
    %78 = vmatprep.subr.bf16.mxu0 0
    %79 = vmatpush1.bf16.msra.mxu0 0
    %80 = vmatprep.subr.bf16.mxu0 0
    %81 = vmatpush1.bf16.msra.mxu0 0
    %82 = vmatprep.subr.bf16.mxu0 0
    %83 = vmatpush1.bf16.msra.mxu0 0
    %84 = vmatprep.subr.bf16.mxu0 0
    %85 = vmatpush1.bf16.msra.mxu0 0
    %86 = vmatprep.subr.bf16.mxu0 0
    %87 = vmatpush1.bf16.msra.mxu0 0
    %88 = vmatprep.subr.bf16.mxu0 0
    %89 = vmatpush1.bf16.msra.mxu0 0
    %90 = vmatprep.subr.bf16.mxu0 0
    %91 = vmatpush1.bf16.msra.mxu0 0
    %92 = vmatprep.subr.bf16.mxu0 0
    %93 = vmatpush1.bf16.msra.mxu0 0
    %94 = vmatprep.subr.bf16.mxu0 0
    %95 = vmatpush1.bf16.msra.mxu0 0
    %96 = vmatprep.subr.bf16.mxu0 0
    %97 = vmatpush1.bf16.msra.mxu0 0
    %98 = vmatprep.subr.bf16.mxu0 0
    %99 = vmatpush1.bf16.msra.mxu0 0
    %100 = vmatprep.subr.bf16.mxu0 0
    %101 = vmatpush1.bf16.msra.mxu0 0
    %102 = vmatprep.mubr.bf16.mxu0 0
    %103 = vmatmul.mubr.bf16.gmra.mrb[0].mxu0 %v68
    %v104 = vpop.f32.mrb[0].mxu0
    %v105 = vadd.f32 %v53, %v104
    %v106 = vpop.f32.mrb[0].mxu0
    %v107 = vpop.f32.mrb[0].mxu0
    %v108 = vadd.f32 %v53, %v107
    %v109 = vpop.f32.mrb[0].mxu0
    %110 = vdwg.mxu0
    %vm111 = vcmask 261120
    %112 = vst.msk [vmem:[#allocation7] sm:$0xff] %vm111, %v105
    %113 = vst.msk [vmem:[#allocation7 + $0x8] sm:$0xff] %vm111, %v108
    // Predicated region
    $region22: #{tpu_custom_call.1} parent=1 // pred_check
      _
    $region23: #{tpu_custom_call.1} parent=1 // pred_check_branch
      %115 = sbr.rel (0) target = $region25
    $region24: #{tpu_custom_call.1} parent=1 // pred_region
      %s117 = ssub.s32 256, 256
      %118 = vsyncadd [#allocation4], %s117
      %s119 = sshll.u32 [#allocation7], 4
      %s120 = int_to_ptr.vmem [resolvable:$true] %s119
      %125 = dma.vmem_to_hbm [thread:$0]  %s120, 256, %s3, [#allocation4], 128, 128, 8
    $region25: #{tpu_custom_call.1} parent=1 // pred_fallthru
      _
    // Predicated region
    $region26: #{tpu_custom_call.1} parent=1 // pred_check
      _
    $region27: #{tpu_custom_call.1} parent=1 // pred_check_branch
      %127 = sbr.rel (0) target = $region29
    $region28: #{tpu_custom_call.1} parent=1 // pred_region
      %128 = dma.done [#allocation4], 256
    $region29: #{tpu_custom_call.1} parent=1 // pred_fallthru
      _
    %129 = vsyncpa [#allocation3], 1
    %130 = vsyncpa [#allocation6], 1
    %131 = vsyncpa [#allocation4], 1

</llo_original>
